<compile_context>
chip_gen: v6e
topology: v6e:2x2x1
jax: 0.10.0
libtpu: 0.0.40
codegen_flags: <defaults>
</compile_context>

<pallas_src>
import functools

import jax
import jax.numpy as jnp
from jax import lax
from jax.experimental import pallas as pl
from jax.experimental.pallas import tpu as pltpu

NEG_SLOPE = 0.01   # torch.nn.LeakyReLU default
NUM_SLABS = 2      # leading parallel axis -> 2 TensorCores on v7x; harmless on 1-TC chips


def _round_up(v, m):
    return (v + m - 1) // m * m


def _cdiv(a, b):
    return (a + b - 1) // b


def _pool_kernel(x_ref, idx_ref, pooled_ref, counts_ref, pooled_acc, counts_acc,
                 *, n_total, tile_n, tiles_per_slab):
    # x_ref:      [tile_n, D]  raw node features (f32), unpadded / possibly ragged tail
    # idx_ref:    [1, tile_n]  int32 cluster id per node
    # pooled_ref: [Bp, D]      this slab's partial scatter-sum of x   (block of [S,Bp,D])
    # counts_ref: [Bp, 1]      this slab's partial per-cluster counts (block of [S,Bp,1])
    # scratch:    pooled_acc [Bp, D] f32, counts_acc [Bp, 1] f32
    c = pl.program_id(0)          # slab index (parallel across TensorCores)
    i = pl.program_id(1)          # tile within slab (reduction axis)

    @pl.when(i == 0)
    def _init():
        pooled_acc[...] = jnp.zeros_like(pooled_acc)
        counts_acc[...] = jnp.zeros_like(counts_acc)

    Bp = pooled_acc.shape[0]

    # Global row index (into x) of this tile's first element.  Fully out-of-range
    # tiles were clamped in the index_map; the validity mask below zeroes them.
    start = (c * tiles_per_slab + i) * tile_n

    # Zero ragged-tail garbage rows of x so 0*NaN can never reach the MXU.
    row_valid = (start + lax.broadcasted_iota(jnp.int32, (tile_n, 1), 0)) < n_total
    x = jnp.where(row_valid, x_ref[...], 0.0)                       # [tile_n, D]

    # one_hot[b, n] = (index[n] == b) AND column n is a real row; exact 0/1 values.
    col_valid = (start + lax.broadcasted_iota(jnp.int32, (1, tile_n), 1)) < n_total
    row_ids = lax.broadcasted_iota(jnp.int32, (Bp, tile_n), 0)
    one_hot = ((row_ids == idx_ref[...]) & col_valid).astype(jnp.float32)

    # Scatter-sum of raw features (MXU) and per-cluster row counts (XLU).
    pooled_acc[...] += jnp.dot(one_hot, x, preferred_element_type=jnp.float32)
    counts_acc[...] += jnp.sum(one_hot, axis=1, keepdims=True)

    @pl.when(i == pl.num_programs(1) - 1)
    def _finalize():
        pooled_ref[...] = pooled_acc[...]
        counts_ref[...] = counts_acc[...]


def _epilogue_kernel(pooled_ref, counts_ref, w1_ref, b1_ref, w2_ref, b2_ref, out_ref,
                     *, num_slabs):
    # Combine per-slab partials, then (by linearity of scatter-sum and Linear):
    #   scatter(x@W1 + b1) == pooled@W1 + counts*b1
    # followed by the second Linear and LeakyReLU.
    pooled = pooled_ref[0]
    counts = counts_ref[0]
    for s in range(1, num_slabs):          # static, tiny loop (num_slabs <= 2)
        pooled = pooled + pooled_ref[s]
        counts = counts + counts_ref[s]
    new = jnp.dot(pooled, w1_ref[...], preferred_element_type=jnp.float32) \
          + counts * b1_ref[...]
    h = jnp.dot(new, w2_ref[...], preferred_element_type=jnp.float32) + b2_ref[...]
    out_ref[...] = jnp.where(h >= 0, h, NEG_SLOPE * h).astype(out_ref.dtype)


def mlp_forward(x, index, params, batch_size):
    """x: [N, in_size] f32, index: [N] ints in [0, batch_size), params: dict."""
    N, D = x.shape
    H = params["w1"].shape[1]
    Bp = _round_up(batch_size, 8)   # sublane-friendly; extra rows hold LeakyReLU(b2)
                                    # and are sliced away below -- do not remove the slice.

    # --- tile the N axis: target ~2 MiB of x per grid step (fits v7x with 2x buffering)
    target_bytes = 2 << 20
    tile_n = max(512, min(8192, target_bytes // (D * 4)))
    tile_n = _round_up(tile_n, 128)          # keeps index block lane-aligned
    if tile_n >= N:
        tile_n = N                           # single block == full array: no raggedness
        n_blocks = 1
    else:
        n_blocks = _cdiv(N, tile_n)

    num_slabs = NUM_SLABS if n_blocks >= NUM_SLABS else 1
    tiles_per_slab = _cdiv(n_blocks, num_slabs)
    last_block = n_blocks - 1

    # Clamp fully out-of-range blocks to the last real block; their contribution is
    # zeroed by the in-kernel validity mask (global row >= N).
    def x_map(c, i):
        return (jnp.minimum(c * tiles_per_slab + i, last_block), 0)

    def idx_map(c, i):
        return (0, jnp.minimum(c * tiles_per_slab + i, last_block))

    # --- VMEM budget: leave headroom below physical capacity (v7x has only 64 MiB).
    try:
        vmem_cap = int(pltpu.get_tpu_info().vmem_capacity_bytes)
    except Exception:
        vmem_cap = 64 << 20                  # conservative fallback
    vmem_limit = min(max(vmem_cap - (16 << 20), 32 << 20), 100 << 20)

    idx2d = index.astype(jnp.int32).reshape(1, N)

    pooled_p, counts_p = pl.pallas_call(
        functools.partial(_pool_kernel, n_total=N, tile_n=tile_n,
                          tiles_per_slab=tiles_per_slab),
        out_shape=(
            jax.ShapeDtypeStruct((num_slabs, Bp, D), jnp.float32),
            jax.ShapeDtypeStruct((num_slabs, Bp, 1), jnp.float32),
        ),
        grid_spec=pltpu.PrefetchScalarGridSpec(
            num_scalar_prefetch=0,
            grid=(num_slabs, tiles_per_slab),
            in_specs=[
                pl.BlockSpec((tile_n, D), x_map),      # x streamed, unpadded
                pl.BlockSpec((1, tile_n), idx_map),    # index streamed, unpadded
            ],
            out_specs=[
                pl.BlockSpec((None, Bp, D), lambda c, i: (c, 0, 0)),
                pl.BlockSpec((None, Bp, 1), lambda c, i: (c, 0, 0)),
            ],
            scratch_shapes=[
                pltpu.VMEM((Bp, D), jnp.float32),   # pooled-feature accumulator
                pltpu.VMEM((Bp, 1), jnp.float32),   # per-cluster row counts
            ],
        ),
        compiler_params=pltpu.CompilerParams(
            dimension_semantics=("parallel", "arbitrary"),
            vmem_limit_bytes=vmem_limit,
        ),
    )(x.astype(jnp.float32), idx2d)

    # --- tiny epilogue kernel: combine slabs + W1/b1 + W2/b2 + LeakyReLU.
    out = pl.pallas_call(
        functools.partial(_epilogue_kernel, num_slabs=num_slabs),
        out_shape=jax.ShapeDtypeStruct((Bp, D), jnp.float32),
        compiler_params=pltpu.CompilerParams(vmem_limit_bytes=vmem_limit),
    )(
        pooled_p, counts_p,
        params["w1"].astype(jnp.float32),
        params["b1"].reshape(1, H).astype(jnp.float32),
        params["w2"].astype(jnp.float32),
        params["b2"].reshape(1, D).astype(jnp.float32),
    )

    # Padded cluster rows [batch_size, Bp) contain LeakyReLU(b2); slice them away.
    return out[:batch_size, :D]


def init_params(key, in_size, num_cluster):
    """Deterministic init mimicking torch.nn.Linear (uniform +/- 1/sqrt(fan_in))."""
    hidden = num_cluster * in_size
    k1, k2, k3, k4 = jax.random.split(key, 4)
    bound1 = 1.0 / jnp.sqrt(in_size)
    bound2 = 1.0 / jnp.sqrt(hidden)
    return {
        # stored as [in_features, out_features] (transpose of torch layout)
        "w1": jax.random.uniform(k1, (in_size, hidden), jnp.float32, -bound1, bound1),
        "b1": jax.random.uniform(k2, (hidden,), jnp.float32, -bound1, bound1),
        "w2": jax.random.uniform(k3, (hidden, in_size), jnp.float32, -bound2, bound2),
        "b2": jax.random.uniform(k4, (in_size,), jnp.float32, -bound2, bound2),
    }


def mlp_reference(x, index, params, batch_size):
    new_x = x @ params["w1"] + params["b1"]
    agg = jnp.zeros((batch_size, new_x.shape[1]), jnp.float32).at[index].add(new_x)
    h = agg @ params["w2"] + params["b2"]
    return jnp.where(h >= 0, h, NEG_SLOPE * h)


if __name__ == "__main__":
    in_size = 16
    num_cluster = 4
    N = 8            # number of input rows (e.g. nodes)
    batch_size = 2

    key = jax.random.PRNGKey(0)
    kx, ki, kp = jax.random.split(key, 3)
    x = jax.random.normal(kx, (N, in_size), jnp.float32)
    # NOTE: correctness requires all index values to lie in [0, batch_size).
    index = jax.random.randint(ki, (N,), 0, batch_size, jnp.int32)
    params = init_params(kp, in_size, num_cluster)

    out = mlp_forward(x, index, params, batch_size)
    out = jax.block_until_ready(out)

    ref = mlp_reference(x, index, params, batch_size)
    assert out.shape == (batch_size, in_size)
    # Aggregate-first reorder changes f32 summation order -> small rounding diffs.
    assert jnp.allclose(out, ref, atol=1e-4, rtol=1e-4)

    print("KERNEL_OK")
</pallas_src>

<mosaic_0001>
module attributes {stable_mosaic.version = 11 : i64} {
  func.func @_pool_kernel(%arg0: i32, %arg1: i32, %arg2: memref<8x16xf32, #tpu.memory_space<vmem>>, %arg3: memref<1x8xi32, #tpu.memory_space<vmem>>, %arg4: memref<1x8x16xf32, #tpu.memory_space<vmem>>, %arg5: memref<1x8x1xf32, #tpu.memory_space<vmem>>, %arg6: memref<8x16xf32, #tpu.memory_space<vmem>>, %arg7: memref<8x1xf32, #tpu.memory_space<vmem>>) attributes {dimension_semantics = [#tpu.dimension_semantics<parallel>, #tpu.dimension_semantics<arbitrary>], iteration_bounds = array<i64: 1, 1>, scalar_prefetch = 0 : i64, scratch_operands = 2 : i64, tpu.core_type = #tpu.core_type<tc>, window_params = [{transform_indices = @transform_0, window_bounds = array<i64: 8, 16>}, {transform_indices = @transform_1, window_bounds = array<i64: 1, 8>}, {transform_indices = @transform_2, window_bounds = array<i64: 1, 8, 16>}, {transform_indices = @transform_3, window_bounds = array<i64: 1, 8, 1>}]} {
    %c0_i32 = arith.constant 0 : i32
    %0 = arith.cmpi eq, %arg1, %c0_i32 : i32
    %1 = arith.extui %0 : i1 to i32
    %c0_i32_0 = arith.constant 0 : i32
    %2 = arith.cmpi ne, %1, %c0_i32_0 : i32
    scf.if %2 {
      %cst_18 = arith.constant 0.000000e+00 : f32
      %41 = vector.broadcast %cst_18 : f32 to vector<8x16xf32>
      %c0_19 = arith.constant 0 : index
      %c0_20 = arith.constant 0 : index
      %42 = vector.load %arg6[%c0_19, %c0_20] : memref<8x16xf32, #tpu.memory_space<vmem>>, vector<8x16xf32>
      tpu.vector_store %arg6[%c0_19, %c0_20], %41 {strides = array<i32>} : memref<8x16xf32, #tpu.memory_space<vmem>>, vector<8x16xf32>,
      %cst_21 = arith.constant 0.000000e+00 : f32
      %43 = vector.broadcast %cst_21 : f32 to vector<8x1xf32>
      %c0_22 = arith.constant 0 : index
      %c0_23 = arith.constant 0 : index
      %44 = vector.load %arg7[%c0_22, %c0_23] : memref<8x1xf32, #tpu.memory_space<vmem>>, vector<8x1xf32>
      tpu.vector_store %arg7[%c0_22, %c0_23], %43 {strides = array<i32>} : memref<8x1xf32, #tpu.memory_space<vmem>>, vector<8x1xf32>,
    } else {
    }
    %c1_i32 = arith.constant 1 : i32
    %3 = arith.muli %arg0, %c1_i32 : i32
    %4 = arith.addi %3, %arg1 : i32
    %c8_i32 = arith.constant 8 : i32
    %5 = arith.muli %4, %c8_i32 : i32
    %6 = tpu.iota {dimensions = array<i32: 0>} : vector<8x1xi32>
    %7 = vector.broadcast %5 : i32 to vector<8x1xi32>
    %8 = arith.addi %7, %6 : vector<8x1xi32>
    %c8_i32_1 = arith.constant 8 : i32
    %9 = vector.broadcast %c8_i32_1 : i32 to vector<8x1xi32>
    %10 = arith.cmpi slt, %8, %9 : vector<8x1xi32>
    %c0 = arith.constant 0 : index
    %c0_2 = arith.constant 0 : index
    %11 = vector.load %arg2[%c0, %c0_2] : memref<8x16xf32, #tpu.memory_space<vmem>>, vector<8x16xf32>
    %cst = arith.constant 0.000000e+00 : f32
    %12 = vector.shape_cast %10 : vector<8x1xi1> to vector<8x1xi1>
    %13 = vector.broadcast %12 : vector<8x1xi1> to vector<8x16xi1>
    %14 = vector.broadcast %cst : f32 to vector<8x16xf32>
    %15 = arith.select %13, %11, %14 : vector<8x16xi1>, vector<8x16xf32>
    %16 = tpu.iota {dimensions = array<i32: 1>} : vector<1x8xi32>
    %17 = vector.broadcast %5 : i32 to vector<1x8xi32>
    %18 = arith.addi %17, %16 : vector<1x8xi32>
    %c8_i32_3 = arith.constant 8 : i32
    %19 = vector.broadcast %c8_i32_3 : i32 to vector<1x8xi32>
    %20 = arith.cmpi slt, %18, %19 : vector<1x8xi32>
    %21 = tpu.iota {dimensions = array<i32: 0>} : vector<8x8xi32>
    %c0_4 = arith.constant 0 : index
    %c0_5 = arith.constant 0 : index
    %22 = vector.load %arg3[%c0_4, %c0_5] : memref<1x8xi32, #tpu.memory_space<vmem>>, vector<1x8xi32>
    %23 = vector.broadcast %22 : vector<1x8xi32> to vector<8x8xi32>
    %24 = arith.cmpi eq, %21, %23 : vector<8x8xi32>
    %25 = vector.broadcast %20 : vector<1x8xi1> to vector<8x8xi1>
    %26 = arith.andi %24, %25 : vector<8x8xi1>
    %27 = arith.extui %26 : vector<8x8xi1> to vector<8x8xi32>
    %28 = arith.sitofp %27 : vector<8x8xi32> to vector<8x8xf32>
    %c0_6 = arith.constant 0 : index
    %c0_7 = arith.constant 0 : index
    %29 = vector.load %arg6[%c0_6, %c0_7] : memref<8x16xf32, #tpu.memory_space<vmem>>, vector<8x16xf32>
    %cst_8 = arith.constant dense<0.000000e+00> : vector<8x16xf32>
    %30 = tpu.matmul %28, %15, %cst_8 {dimension_numbers = #tpu.dot_dimension_numbers<[1], [0], [0], [1], [0, 0, 1, 1], [], []>} : vector<8x8xf32>, vector<8x16xf32>, vector<8x16xf32> -> vector<8x16xf32>
    %31 = arith.addf %29, %30 : vector<8x16xf32>
    %c0_9 = arith.constant 0 : index
    %c0_10 = arith.constant 0 : index
    %32 = vector.load %arg6[%c0_9, %c0_10] : memref<8x16xf32, #tpu.memory_space<vmem>>, vector<8x16xf32>
    tpu.vector_store %arg6[%c0_9, %c0_10], %31 {strides = array<i32>} : memref<8x16xf32, #tpu.memory_space<vmem>>, vector<8x16xf32>,
    %c0_11 = arith.constant 0 : index
    %c0_12 = arith.constant 0 : index
    %33 = vector.load %arg7[%c0_11, %c0_12] : memref<8x1xf32, #tpu.memory_space<vmem>>, vector<8x1xf32>
    %cst_13 = arith.constant dense<0.000000e+00> : vector<8xf32>
    %34 = vector.multi_reduction <add>, %28, %cst_13 [1] : vector<8x8xf32> to vector<8xf32>
    %35 = vector.shape_cast %34 : vector<8xf32> to vector<8x1xf32>
    %36 = arith.addf %33, %35 : vector<8x1xf32>
    %c0_14 = arith.constant 0 : index
    %c0_15 = arith.constant 0 : index
    %37 = vector.load %arg7[%c0_14, %c0_15] : memref<8x1xf32, #tpu.memory_space<vmem>>, vector<8x1xf32>
    tpu.vector_store %arg7[%c0_14, %c0_15], %36 {strides = array<i32>} : memref<8x1xf32, #tpu.memory_space<vmem>>, vector<8x1xf32>,
    %c0_i32_16 = arith.constant 0 : i32
    %38 = arith.cmpi eq, %arg1, %c0_i32_16 : i32
    %39 = arith.extui %38 : i1 to i32
    %c0_i32_17 = arith.constant 0 : i32
    %40 = arith.cmpi ne, %39, %c0_i32_17 : i32
    scf.if %40 {
      %c0_18 = arith.constant 0 : index
      %c0_19 = arith.constant 0 : index
      %41 = vector.load %arg6[%c0_18, %c0_19] : memref<8x16xf32, #tpu.memory_space<vmem>>, vector<8x16xf32>
      %c0_20 = arith.constant 0 : index
      %c0_21 = arith.constant 0 : index
      %c0_22 = arith.constant 0 : index
      %42 = vector.load %arg4[%c0_20, %c0_21, %c0_22] : memref<1x8x16xf32, #tpu.memory_space<vmem>>, vector<1x8x16xf32>
      %43 = vector.shape_cast %42 : vector<1x8x16xf32> to vector<8x16xf32>
      %44 = vector.shape_cast %41 : vector<8x16xf32> to vector<1x8x16xf32>
      tpu.vector_store %arg4[%c0_20, %c0_21, %c0_22], %44 {strides = array<i32>} : memref<1x8x16xf32, #tpu.memory_space<vmem>>, vector<1x8x16xf32>,
      %c0_23 = arith.constant 0 : index
      %c0_24 = arith.constant 0 : index
      %45 = vector.load %arg7[%c0_23, %c0_24] : memref<8x1xf32, #tpu.memory_space<vmem>>, vector<8x1xf32>
      %c0_25 = arith.constant 0 : index
      %c0_26 = arith.constant 0 : index
      %c0_27 = arith.constant 0 : index
      %46 = vector.load %arg5[%c0_25, %c0_26, %c0_27] : memref<1x8x1xf32, #tpu.memory_space<vmem>>, vector<1x8x1xf32>
      %47 = vector.shape_cast %46 : vector<1x8x1xf32> to vector<8x1xf32>
      %48 = vector.shape_cast %45 : vector<8x1xf32> to vector<1x8x1xf32>
      tpu.vector_store %arg5[%c0_25, %c0_26, %c0_27], %48 {strides = array<i32>} : memref<1x8x1xf32, #tpu.memory_space<vmem>>, vector<1x8x1xf32>,
    } else {
    }
    return
  }
  func.func @transform_0(%arg0: i32, %arg1: i32) -> (i32, i32) {
    %c1_i32 = arith.constant 1 : i32
    %0 = arith.muli %arg0, %c1_i32 : i32
    %1 = arith.addi %0, %arg1 : i32
    %c0_i32 = arith.constant 0 : i32
    %2 = arith.minsi %1, %c0_i32 : i32
    %c0_i32_0 = arith.constant 0 : i32
    %c0_i32_1 = arith.constant 0 : i32
    return %2, %c0_i32_0 : i32, i32
  }
  func.func @transform_1(%arg0: i32, %arg1: i32) -> (i32, i32) {
    %c1_i32 = arith.constant 1 : i32
    %0 = arith.muli %arg0, %c1_i32 : i32
    %1 = arith.addi %0, %arg1 : i32
    %c0_i32 = arith.constant 0 : i32
    %2 = arith.minsi %1, %c0_i32 : i32
    %c0_i32_0 = arith.constant 0 : i32
    %c0_i32_1 = arith.constant 0 : i32
    return %c0_i32_0, %2 : i32, i32
  }
  func.func @transform_2(%arg0: i32, %arg1: i32) -> (i32, i32, i32) {
    %c0_i32 = arith.constant 0 : i32
    %c0_i32_0 = arith.constant 0 : i32
    %c0_i32_1 = arith.constant 0 : i32
    return %arg0, %c0_i32, %c0_i32_0 : i32, i32, i32
  }
  func.func @transform_3(%arg0: i32, %arg1: i32) -> (i32, i32, i32) {
    %c0_i32 = arith.constant 0 : i32
    %c0_i32_0 = arith.constant 0 : i32
    %c0_i32_1 = arith.constant 0 : i32
    return %arg0, %c0_i32, %c0_i32_0 : i32, i32, i32
  }
}

</mosaic_0001>

<llo_original>
// kernel: tpu_custom_call.1
$region0: #{tpu_custom_call.1}
  #allocation0 [shape = 'u32[]', space=smem, size = 0x4, offset = 0x4, fixed_abs, tag = 'smem constant byte address 0x4 - core index']
  #allocation1 [shape = 'u32[144,128]{1,0:T(1,128)}', space=vmem, size = 0x12000, scoped, tag = 'internal scratch']
  #allocation2 [shape = 'f32[8,16]{1,0:T(8,128)}', space=vmem, size = 0x1000, scoped, tag = 'scratch operand']
  #allocation3 [shape = 'f32[8,1]{1,0:T(8,128)}', space=vmem, size = 0x1000, scoped, tag = 'scratch operand']
  %s0 = inlined_call_operand.hbm [shape: f32[8,16], index: 0, kind: input, shape index: {}]
  %s1 = inlined_call_operand.vmem [shape: s32[1,8], index: 1, kind: input, shape index: {}]
  %s2 = inlined_call_operand.hbm [shape: f32[1,8,16], index: 2, kind: output, shape index: {0}]
  %s3 = inlined_call_operand.vmem [shape: f32[1,8,1], index: 3, kind: output, shape index: {1}]
  %4 = xla_tuple %s2, %s3
  %s5 = sld [smem:[#allocation0]]
  $region38: #{tpu_custom_call.1} parent=0
    _
  %s7 = ssub.s32 1, %s5
  %s8 = scalar_select 0, %s7, %s5
  $region1: #{tpu_custom_call.1} parent=0
    #allocation4 [shape = 'u8[4096]{0}', space=vmem, size = 0x1000, scoped, tag = 'input window, operand 0, single buffered']
    #allocation5 [shape = 's32[1]{0}', space=sflag, size = 0x4, scoped, tag = 'scoped memory for tpu_custom_call.1']
    #allocation6 [shape = 's32[1]{0}', space=sflag, size = 0x4, scoped, tag = 'scoped memory for tpu_custom_call.1']
    #allocation7 [shape = 'u8[4096]{0}', space=vmem, size = 0x1000, scoped, tag = 'output window, operand 0, single buffered']
    %9 = vsyncpa [#allocation5], 0
    %10 = vsyncpa [#allocation6], 0
    // Predicated region
    $region2: #{tpu_custom_call.1} parent=1 // pred_check
      _
    $region3: #{tpu_custom_call.1} parent=1 // pred_check_branch
      %12 = sbr.rel (0) target = $region5
    $region4: #{tpu_custom_call.1} parent=1 // pred_region
      %s13 = sadd.s32 0, 0
      %p14 = scmp.lt.s32.totalorder %s13, 0
      %s15 = scalar_select %p14, %s13, 0
      %s17 = ssub.s32 128, 128
      %18 = vsyncadd [#allocation5], %s17
      %s19 = smul.addr %s15, 128
      %s20 = scalar_lea.hbm %s0, %s19
      %s22 = sshll.u32 [#allocation4], 4
      %s23 = int_to_ptr.vmem [resolvable:$true] %s22
      %25 = dma.hbm_to_vmem [thread:$0]  %s20, 128, %s23, [#allocation5]
    $region5: #{tpu_custom_call.1} parent=1 // pred_fallthru
      _
    // Predicated region
    $region6: #{tpu_custom_call.1} parent=1 // pred_check
      _
    $region7: #{tpu_custom_call.1} parent=1 // pred_check_branch
      %27 = sbr.rel (0) target = $region9
    $region8: #{tpu_custom_call.1} parent=1 // pred_region
      %s28 = sadd.s32 0, 0
      %p29 = scmp.lt.s32.totalorder %s28, 0
      %s30 = scalar_select %p29, %s28, 0
      %p31 = scmp.lt.s32.totalorder %s30, 0
      %s32 = scalar_select %p31, %s30, 0
      %s33 = scalar_lea.vmem %s1, %s32
      %s34 = sadd.s32 0, 0
      %p35 = scmp.lt.s32.totalorder %s34, 0
      %s36 = scalar_select %p35, %s34, 0
    $region9: #{tpu_custom_call.1} parent=1 // pred_fallthru
      _
    // Predicated region
    $region10: #{tpu_custom_call.1} parent=1 // pred_check
      _
    $region11: #{tpu_custom_call.1} parent=1 // pred_check_branch
      %38 = sbr.rel (0) target = $region13
    $region12: #{tpu_custom_call.1} parent=1 // pred_region
      %39 = dma.done [#allocation5], 128
    $region13: #{tpu_custom_call.1} parent=1 // pred_fallthru
      _
    %s40 = sadd.s32 0, 0
    %p41 = scmp.lt.s32.totalorder %s40, 0
    %s42 = scalar_select %p41, %s40, 0
    %p43 = scmp.lt.s32.totalorder %s42, 0
    %s44 = scalar_select %p43, %s42, 0
    %s45 = scalar_lea.vmem %s1, %s44
    %s46 = sadd.s32 0, 0
    %p47 = scmp.lt.s32.totalorder %s46, 0
    %s48 = scalar_select %p47, %s46, 0
    %s49 = sadd.s32 0, 0
    %p50 = scmp.lt.s32.totalorder %s49, 0
    %s51 = scalar_select %p50, %s49, 0
    %p52 = scmp.lt.s32.totalorder %s51, 0
    %s53 = scalar_select %p52, %s51, 0
    %s54 = scalar_lea.vmem %s1, %s53
    %s55 = sadd.s32 0, 0
    %p56 = scmp.lt.s32.totalorder %s55, 0
    %s57 = scalar_select %p56, %s55, 0
    %p58 = scmp.eq.s32.totalorder 0, 0
    // Predicated region
    $region14: #{tpu_custom_call.1} parent=1 // pred_check
      %p59 = pneg %p58
    $region15: #{tpu_custom_call.1} parent=1 // pred_check_branch
      %61 = sbr.rel (%p59) target = $region17
    $region16: #{tpu_custom_call.1} parent=1 // pred_region
      %vm62 = vcmask 130048
      %63 = vst.msk [vmem:[#allocation2] sm:$0xff] %vm62, 0.0
      %vm64 = vcmask 7168
      %65 = vst.msk [vmem:[#allocation3] sm:$0xff] %vm64, 0.0
    $region17: #{tpu_custom_call.1} parent=1 // pred_fallthru
      _
    %s66 = sadd.s32 0, 0
    %s67 = smul.u32 %s66, 8
    %v68 = vlaneseq
    %v69 = vshrl.u32 %v68, 7
    %v70 = vstv %s67
    %v71 = vadd.s32 %v70, %v69
    %vm72 = vcmp.lt.s32.totalorder %v71, 8
    %v73 = vld [vmem:[#allocation4] sm:$0xff]
    %v74 = vsel %vm72, 1, 0
    %vm75 = vcmp.eq.s32.totalorder %v74, 1
    %v76 = vsel %vm75, %v73, 0.0
    %v77 = vlaneseq
    %v78 = vand.u32 %v77, 127
    %v79 = vadd.s32 %v70, %v78
    %vm80 = vcmp.lt.s32.totalorder %v79, 8
    %v81 = vld [vmem:[%s54] sm:$0x1]
    %v82 = vlaneseq
    %v83 = vshrl.u32 %v82, 7
    %v84 = vsub.s32 0, %v83
    %v85 = vrot.slane %v81, %v84
    %vm86 = vcmp.eq.s32.totalorder %v69, %v85
    %v87 = vsel %vm80, 1, 0
    %vm88 = vcmp.eq.s32.totalorder %v87, 1
    %vm89 = vmand %vm86, %vm88
    %v90 = vsel %vm89, 1, 0
    %v91 = vcvt.s32.f32 %v90
    %v92 = vld [vmem:[#allocation2] sm:$0xff]
    %vm93 = vcmask 64512
    %v95 = vsel %vm93, %v91, 0
    %97 = vmatprep.subr.mxu0 0.0
    %98 = vmatpush1.msra.mxu0 0.0
    %99 = vmatprep.subr.mxu0 0.0
    %100 = vmatpush1.msra.mxu0 0.0
    %101 = vmatprep.subr.mxu0 0.0
    %102 = vmatpush1.msra.mxu0 0.0
    %103 = vmatprep.subr.mxu0 0.0
    %104 = vmatpush1.msra.mxu0 0.0
    %105 = vmatprep.subr.mxu0 0.0
    %106 = vmatpush1.msra.mxu0 0.0
    %107 = vmatprep.subr.mxu0 0.0
    %108 = vmatpush1.msra.mxu0 0.0
    %109 = vmatprep.subr.mxu0 0.0
    %110 = vmatpush1.msra.mxu0 0.0
    %111 = vmatprep.subr.mxu0 0.0
    %112 = vmatpush1.msra.mxu0 0.0
    %113 = vmatprep.subr.mxu0 0.0
    %114 = vmatpush1.msra.mxu0 0.0
    %115 = vmatprep.subr.mxu0 0.0
    %116 = vmatpush1.msra.mxu0 0.0
    %117 = vmatprep.subr.mxu0 0.0
    %118 = vmatpush1.msra.mxu0 0.0
    %119 = vmatprep.subr.mxu0 0.0
    %120 = vmatpush1.msra.mxu0 0.0
    %121 = vmatprep.subr.mxu0 0.0
    %122 = vmatpush1.msra.mxu0 0.0
    %123 = vmatprep.subr.mxu0 0.0
    %124 = vmatpush1.msra.mxu0 0.0
    %125 = vmatprep.subr.mxu0 0.0
    %126 = vmatpush1.msra.mxu0 0.0
    %127 = vmatprep.subr.mxu0 0.0
    %128 = vmatpush1.msra.mxu0 %v76
    %129 = vmatprep.subr.mxu0 0.0
    %130 = vmatpush2.msra.mxu0 0.0
    %131 = vmatprep.subr.mxu0 0.0
    %132 = vmatpush2.msra.mxu0 0.0
    %133 = vmatprep.subr.mxu0 0.0
    %134 = vmatpush2.msra.mxu0 0.0
    %135 = vmatprep.subr.mxu0 0.0
    %136 = vmatpush2.msra.mxu0 0.0
    %137 = vmatprep.subr.mxu0 0.0
    %138 = vmatpush2.msra.mxu0 0.0
    %139 = vmatprep.subr.mxu0 0.0
    %140 = vmatpush2.msra.mxu0 0.0
    %141 = vmatprep.subr.mxu0 0.0
    %142 = vmatpush2.msra.mxu0 0.0
    %143 = vmatprep.subr.mxu0 0.0
    %144 = vmatpush2.msra.mxu0 0.0
    %145 = vmatprep.subr.mxu0 0.0
    %146 = vmatpush2.msra.mxu0 0.0
    %147 = vmatprep.subr.mxu0 0.0
    %148 = vmatpush2.msra.mxu0 0.0
    %149 = vmatprep.subr.mxu0 0.0
    %150 = vmatpush2.msra.mxu0 0.0
    %151 = vmatprep.subr.mxu0 0.0
    %152 = vmatpush2.msra.mxu0 0.0
    %153 = vmatprep.subr.mxu0 0.0
    %154 = vmatpush2.msra.mxu0 0.0
    %155 = vmatprep.subr.mxu0 0.0
    %156 = vmatpush2.msra.mxu0 0.0
    %157 = vmatprep.subr.mxu0 0.0
    %158 = vmatpush2.msra.mxu0 0.0
    %159 = vmatprep.subr.mxu0 0.0
    %160 = vmatpush2.msra.mxu0 0.0
    %161 = vmatprep.mubr.f32.mxu0 0.0
    %162 = vmatmul.mubr.f32.gmra.mxu0 %v95
    %v163 = vpop.f32.mrf.mxu0
    %v164 = vadd.f32 0.0, %v163
    %v165 = vpop.f32.mrf.mxu0
    %166 = vdwg.mxu0
    %v167 = vadd.f32 %v92, %v164
    %vm168 = vcmask 130048
    %169 = vst.msk [vmem:[#allocation2] sm:$0xff] %vm168, %v167
    %v170 = vld [vmem:[#allocation3] sm:$0xff]
    %v171 = vsel %vm93, %v91, 0.0
    %172 = vadd.xlane.f32.xlu0 %v171
    %v173 = vpop.xlane.xlu0 %172
    %v174 = vadd.f32 %v170, %v173
    %vm175 = vcmask 7168
    %176 = vst.msk [vmem:[#allocation3] sm:$0xff] %vm175, %v174
    // Predicated region
    $region18: #{tpu_custom_call.1} parent=1 // pred_check
      %p177 = pneg %p58
    $region19: #{tpu_custom_call.1} parent=1 // pred_check_branch
      %179 = sbr.rel (%p177) target = $region21
    $region20: #{tpu_custom_call.1} parent=1 // pred_region
      %v180 = vld [vmem:[#allocation2] sm:$0xff]
      %181 = vst.msk [vmem:[#allocation7] sm:$0xff] %vm168, %v180
      %v182 = vld [vmem:[#allocation3] sm:$0xff]
      %183 = vst.msk [vmem:[%s3] sm:$0xff] %vm175, %v182
    $region21: #{tpu_custom_call.1} parent=1 // pred_fallthru
      _
    // Predicated region
    $region22: #{tpu_custom_call.1} parent=1 // pred_check
      _
    $region23: #{tpu_custom_call.1} parent=1 // pred_check_branch
      %185 = sbr.rel (0) target = $region25
    $region24: #{tpu_custom_call.1} parent=1 // pred_region
      %s187 = ssub.s32 128, 128
      %188 = vsyncadd [#allocation6], %s187
      %s190 = sshll.u32 [#allocation7], 4
      %s191 = int_to_ptr.vmem [resolvable:$true] %s190
      %193 = dma.vmem_to_hbm [thread:$0]  %s191, 128, %s2, [#allocation6]
    $region25: #{tpu_custom_call.1} parent=1 // pred_fallthru
      _
    // Predicated region
    $region26: #{tpu_custom_call.1} parent=1 // pred_check
      _
    $region27: #{tpu_custom_call.1} parent=1 // pred_check_branch
      %195 = sbr.rel (0) target = $region29
    $region28: #{tpu_custom_call.1} parent=1 // pred_region
      _
    $region29: #{tpu_custom_call.1} parent=1 // pred_fallthru
      _
    // Predicated region
    $region30: #{tpu_custom_call.1} parent=1 // pred_check
      _
    $region31: #{tpu_custom_call.1} parent=1 // pred_check_branch
      %197 = sbr.rel (0) target = $region33
    $region32: #{tpu_custom_call.1} parent=1 // pred_region
      %198 = dma.done [#allocation6], 128
    $region33: #{tpu_custom_call.1} parent=1 // pred_fallthru
      _
    // Predicated region
    $region34: #{tpu_custom_call.1} parent=1 // pred_check
      _
    $region35: #{tpu_custom_call.1} parent=1 // pred_check_branch
      %200 = sbr.rel (0) target = $region37
    $region36: #{tpu_custom_call.1} parent=1 // pred_region
      _
    $region37: #{tpu_custom_call.1} parent=1 // pred_fallthru
      _
    %201 = vsyncpa [#allocation5], 1
    %202 = vsyncpa [#allocation6], 1

</llo_original>
